<compile_context>
chip_gen: v7x
topology: tpu7x:2x2x1
jax: 0.10.0
libtpu: 0.0.40
codegen_flags: <defaults>
</compile_context>

<pallas_src>
import jax
import jax.numpy as jnp
from jax.experimental import pallas as pl
from jax.experimental.pallas import tpu as pltpu


def _convtranspose_bn_silu_kernel(x_ref, w_ref, scale_ref, shift_ref, o_ref):
    # x_ref     : (1, C1, H*W)    one batch element, lanes = H*W (dense)
    # w_ref     : (M, C1)         M = C2*k*k, rows ordered (co, kh, kw)
    # scale_ref : (M, 1)          folded BN scale  gamma / sqrt(var + eps)
    # shift_ref : (M, 1)          folded BN shift  beta - mean * scale
    # o_ref     : (1, M, H*W)
    x = x_ref[0]                                              # (C1, HW)
    y = jnp.dot(w_ref[...], x,
                preferred_element_type=jnp.float32,
                precision=jax.lax.Precision.HIGHEST)          # MXU: (M, HW)
    y = y * scale_ref[...] + shift_ref[...]                   # BatchNorm (eval)
    o_ref[0] = (y * jax.nn.sigmoid(y)).astype(o_ref.dtype)    # SiLU gate


def conv_transpose_bn_silu(x, weight, gamma, beta, running_mean, running_var,
                           eps=1e-5):
    """x: (B, C1, H, W) f32; weight: (C1, C2, 2, 2) f32 (PyTorch layout).

    Returns SiLU(BN(ConvTranspose2d(x))) with k=2, s=2, p=0, bias=False,
    BatchNorm in inference mode (running statistics), shape (B, C2, 2H, 2W).
    """
    B, C1, H, W = x.shape
    C1w, C2, KH, KW = weight.shape
    assert C1w == C1 and KH == 2 and KW == 2, "module defaults: k=2, s=2, p=0"
    HW = H * W
    M = C2 * KH * KW

    # --- layout plumbing (no compute) -------------------------------------
    x2 = x.reshape(B, C1, HW).astype(jnp.float32)          # contiguous reshape
    # rows of w2 ordered (co, kh, kw); columns = ci
    w2 = weight.reshape(C1, M).T.astype(jnp.float32)       # (M, C1)

    # BN folded into a per-row affine (each output channel repeated k*k times).
    scale = (gamma / jnp.sqrt(running_var + eps)).astype(jnp.float32)
    shift = (beta - running_mean * scale).astype(jnp.float32)
    scale_full = jnp.repeat(scale, KH * KW).reshape(M, 1)
    shift_full = jnp.repeat(shift, KH * KW).reshape(M, 1)

    y = pl.pallas_call(
        _convtranspose_bn_silu_kernel,
        out_shape=jax.ShapeDtypeStruct((B, M, HW), jnp.float32),
        grid_spec=pltpu.PrefetchScalarGridSpec(
            num_scalar_prefetch=0,
            grid=(B,),
            in_specs=[
                pl.BlockSpec((1, C1, HW), lambda b: (b, 0, 0)),
                pl.BlockSpec((M, C1), lambda b: (0, 0)),
                pl.BlockSpec((M, 1), lambda b: (0, 0)),
                pl.BlockSpec((M, 1), lambda b: (0, 0)),
            ],
            out_specs=pl.BlockSpec((1, M, HW), lambda b: (b, 0, 0)),
        ),
        compiler_params=pltpu.CompilerParams(
            dimension_semantics=("parallel",),   # batch elements independent
        ),
    )(x2, w2, scale_full, shift_full)

    # Interleave the 2x2 sub-grids: (B, C2, kh, kw, H, W) -> (B, C2, 2H, 2W).
    y = y.reshape(B, C2, KH, KW, H, W)
    y = y.transpose(0, 1, 4, 2, 5, 3)           # (B, C2, H, kh, W, kw)
    return y.reshape(B, C2, H * KH, W * KW)


def _reference(x, weight, gamma, beta, running_mean, running_var, eps=1e-5):
    """ConvTranspose2d(k=2, s=2, p=0, bias=False) + BN(eval) + SiLU via XLA."""
    k, s, p = 2, 2, 0
    w_flip = weight[:, :, ::-1, ::-1]                    # flip spatial dims
    w_oihw = jnp.transpose(w_flip, (1, 0, 2, 3))         # (C2, C1, k, k)
    pad = k - 1 - p
    y = jax.lax.conv_general_dilated(
        x, w_oihw, window_strides=(1, 1),
        padding=((pad, pad), (pad, pad)),
        lhs_dilation=(s, s),
        dimension_numbers=("NCHW", "OIHW", "NCHW"),
        precision=jax.lax.Precision.HIGHEST)
    scale = gamma / jnp.sqrt(running_var + eps)
    shift = beta - running_mean * scale
    y = y * scale[None, :, None, None] + shift[None, :, None, None]
    return y * jax.nn.sigmoid(y)


if __name__ == "__main__":
    key = jax.random.PRNGKey(0)
    k1, k2, k3, k4, k5, k6 = jax.random.split(key, 6)

    B, C1, C2, H, W, K = 2, 4, 8, 16, 16, 2
    x = jax.random.normal(k1, (B, C1, H, W), dtype=jnp.float32)
    fan_in = C1 * K * K
    weight = jax.random.normal(k2, (C1, C2, K, K), dtype=jnp.float32)
    weight = weight * (1.0 / jnp.sqrt(fan_in))
    gamma = 1.0 + 0.1 * jax.random.normal(k3, (C2,), dtype=jnp.float32)
    beta = 0.1 * jax.random.normal(k4, (C2,), dtype=jnp.float32)
    running_mean = 0.1 * jax.random.normal(k5, (C2,), dtype=jnp.float32)
    running_var = 0.5 + jnp.abs(jax.random.normal(k6, (C2,), dtype=jnp.float32))

    out = conv_transpose_bn_silu(x, weight, gamma, beta,
                                 running_mean, running_var)
    out = jax.block_until_ready(out)

    ref = _reference(x, weight, gamma, beta, running_mean, running_var)
    assert out.shape == (B, C2, 2 * H, 2 * W)
    assert jnp.allclose(out, ref, atol=1e-4, rtol=1e-4), "mismatch vs reference"

    print("KERNEL_OK")
</pallas_src>

<mosaic_0001>
module attributes {stable_mosaic.version = 11 : i64} {
  func.func @_convtranspose_bn_silu_kernel(%arg0: i32, %arg1: memref<1x4x256xf32, #tpu.memory_space<vmem>>, %arg2: memref<32x4xf32, #tpu.memory_space<vmem>>, %arg3: memref<32x1xf32, #tpu.memory_space<vmem>>, %arg4: memref<32x1xf32, #tpu.memory_space<vmem>>, %arg5: memref<1x32x256xf32, #tpu.memory_space<vmem>>) attributes {dimension_semantics = [#tpu.dimension_semantics<parallel>], iteration_bounds = array<i64: 2>, scalar_prefetch = 0 : i64, scratch_operands = 0 : i64, tpu.core_type = #tpu.core_type<tc>, window_params = [{transform_indices = @transform_0, window_bounds = array<i64: 1, 4, 256>}, {pipeline_mode = #tpu.pipeline_mode<synchronous>, transform_indices = @transform_1, window_bounds = array<i64: 32, 4>}, {pipeline_mode = #tpu.pipeline_mode<synchronous>, transform_indices = @transform_2, window_bounds = array<i64: 32, 1>}, {pipeline_mode = #tpu.pipeline_mode<synchronous>, transform_indices = @transform_3, window_bounds = array<i64: 32, 1>}, {transform_indices = @transform_4, window_bounds = array<i64: 1, 32, 256>}]} {
    %c0 = arith.constant 0 : index
    %c0_0 = arith.constant 0 : index
    %c0_1 = arith.constant 0 : index
    %0 = vector.load %arg1[%c0, %c0_0, %c0_1] : memref<1x4x256xf32, #tpu.memory_space<vmem>>, vector<1x4x256xf32>
    %1 = vector.shape_cast %0 : vector<1x4x256xf32> to vector<4x256xf32>
    %c0_2 = arith.constant 0 : index
    %c0_3 = arith.constant 0 : index
    %2 = vector.load %arg2[%c0_2, %c0_3] : memref<32x4xf32, #tpu.memory_space<vmem>>, vector<32x4xf32>
    %cst = arith.constant dense<0.000000e+00> : vector<32x256xf32>
    %3 = tpu.matmul %2, %1, %cst {dimension_numbers = #tpu.dot_dimension_numbers<[1], [0], [0], [1], [0, 0, 1, 1], [], []>, precision = #tpu.contract_precision<fp32>} : vector<32x4xf32>, vector<4x256xf32>, vector<32x256xf32> -> vector<32x256xf32>
    %c0_4 = arith.constant 0 : index
    %c0_5 = arith.constant 0 : index
    %4 = vector.load %arg3[%c0_4, %c0_5] : memref<32x1xf32, #tpu.memory_space<vmem>>, vector<32x1xf32>
    %5 = vector.broadcast %4 : vector<32x1xf32> to vector<32x256xf32>
    %6 = arith.mulf %3, %5 : vector<32x256xf32>
    %c0_6 = arith.constant 0 : index
    %c0_7 = arith.constant 0 : index
    %7 = vector.load %arg4[%c0_6, %c0_7] : memref<32x1xf32, #tpu.memory_space<vmem>>, vector<32x1xf32>
    %8 = vector.broadcast %7 : vector<32x1xf32> to vector<32x256xf32>
    %9 = arith.addf %6, %8 : vector<32x256xf32>
    %10 = arith.negf %9 : vector<32x256xf32>
    %11 = math.exp %10 : vector<32x256xf32>
    %cst_8 = arith.constant 1.000000e+00 : f32
    %12 = vector.broadcast %cst_8 : f32 to vector<32x256xf32>
    %13 = arith.addf %12, %11 : vector<32x256xf32>
    %14 = arith.divf %12, %13 : vector<32x256xf32>
    %15 = arith.mulf %9, %14 : vector<32x256xf32>
    %c0_9 = arith.constant 0 : index
    %c0_10 = arith.constant 0 : index
    %c0_11 = arith.constant 0 : index
    %16 = vector.load %arg5[%c0_9, %c0_10, %c0_11] : memref<1x32x256xf32, #tpu.memory_space<vmem>>, vector<1x32x256xf32>
    %17 = vector.shape_cast %16 : vector<1x32x256xf32> to vector<32x256xf32>
    %18 = vector.shape_cast %15 : vector<32x256xf32> to vector<1x32x256xf32>
    tpu.vector_store %arg5[%c0_9, %c0_10, %c0_11], %18 {strides = array<i32>} : memref<1x32x256xf32, #tpu.memory_space<vmem>>, vector<1x32x256xf32>,
    return
  }
  func.func @transform_0(%arg0: i32) -> (i32, i32, i32) {
    %c0_i32 = arith.constant 0 : i32
    %c0_i32_0 = arith.constant 0 : i32
    %c0_i32_1 = arith.constant 0 : i32
    return %arg0, %c0_i32, %c0_i32_0 : i32, i32, i32
  }
  func.func @transform_1(%arg0: i32) -> (i32, i32) {
    %c0_i32 = arith.constant 0 : i32
    %c0_i32_0 = arith.constant 0 : i32
    %c0_i32_1 = arith.constant 0 : i32
    return %c0_i32, %c0_i32_0 : i32, i32
  }
  func.func @transform_2(%arg0: i32) -> (i32, i32) {
    %c0_i32 = arith.constant 0 : i32
    %c0_i32_0 = arith.constant 0 : i32
    %c0_i32_1 = arith.constant 0 : i32
    return %c0_i32, %c0_i32_0 : i32, i32
  }
  func.func @transform_3(%arg0: i32) -> (i32, i32) {
    %c0_i32 = arith.constant 0 : i32
    %c0_i32_0 = arith.constant 0 : i32
    %c0_i32_1 = arith.constant 0 : i32
    return %c0_i32, %c0_i32_0 : i32, i32
  }
  func.func @transform_4(%arg0: i32) -> (i32, i32, i32) {
    %c0_i32 = arith.constant 0 : i32
    %c0_i32_0 = arith.constant 0 : i32
    %c0_i32_1 = arith.constant 0 : i32
    return %arg0, %c0_i32, %c0_i32_0 : i32, i32, i32
  }
}

</mosaic_0001>

<llo_original>
// kernel: tpu_custom_call.1
$region0: #{tpu_custom_call.1}
  #allocation0 [shape = 'u32[]', space=smem, size = 0x4, offset = 0x4, fixed_abs, tag = 'smem constant byte address 0x4 - core index']
  #allocation1 [shape = 'u32[144,128]{1,0:T(1,128)}', space=vmem, size = 0x12000, scoped, tag = 'internal scratch']
  %s0 = inlined_call_operand.vmem [shape: f32[2,4,256], index: 0, kind: input, shape index: {}]
  %s1 = inlined_call_operand.vmem [shape: f32[32,4], index: 1, kind: input, shape index: {}]
  %s2 = inlined_call_operand.vmem [shape: f32[32,1], index: 2, kind: input, shape index: {}]
  %s3 = inlined_call_operand.vmem [shape: f32[32,1], index: 3, kind: input, shape index: {}]
  %s4 = inlined_call_operand.hbm [shape: f32[2,32,256], index: 4, kind: output, shape index: {}]
  %s5 = sld [smem:[#allocation0]]
  $region49: #{tpu_custom_call.1} parent=0
    _
  %s7 = ssub.s32 1, %s5
  %s8 = scalar_select 0, %s7, %s5
  $region1: #{tpu_custom_call.1} parent=0
    #allocation2 [shape = 'u8[65536]{0}', space=vmem, size = 0x10000, scoped, tag = 'output window, operand 0']
    #allocation3 [shape = 's32[2]{0}', space=sflag, size = 0x8, scoped, tag = 'scoped memory for tpu_custom_call.1']
    %9 = vsyncpa [#allocation3], 0
    %s10 = scalar_lea.sflag [#allocation3], 1
    %11 = vsyncpa %s10, 0
    loop: start=0, step=1, limit=4
    $region2: #{tpu_custom_call.1} parent=1 // loop_pre_header
      _
    $region3: #{tpu_custom_call.1} parent=1 // loop_header
      %s13 = sphi 0, %s17
      %p14 = scmp.ge.s32.totalorder %s13, 4
      %s23 = sphi 0, %s25
      %s26 = sphi 0, %s23
      %s27 = sphi 0, %s26
      %s43 = sphi 0, %s27
      %s47 = sphi 0, %s47
      %s49 = sphi 0, %s47
      %s50 = sphi 0, %s49
      %s64 = sphi 0, %s50
      %s68 = sphi 0, %s68
      %s70 = sphi 0, %s68
      %s71 = sphi 0, %s70
      %s85 = sphi 0, %s71
      %s89 = sphi 0, %s89
      %s91 = sphi 0, %s89
      %s92 = sphi 0, %s91
      %s106 = sphi 0, %s92
      %s112 = sphi 0, %s114
      %s115 = sphi 0, %s112
      %s116 = sphi 0, %s115
      %s132 = sphi 0, %s116
    $region4: #{tpu_custom_call.1} parent=1 // loop_header_branch
      %16 = sbr.rel (%p14) target = $region8
    $region5: #{tpu_custom_call.1} parent=1 // loop_body
      %s18 = ssub.s32 %s13, 1
      %s19 = ssub.s32 %s13, 2
      %s20 = sadd.s32 %s13, 1
      %s21 = ssub.s32 %s13, %s20
      %p22 = scmp.eq.s32.totalorder %s21, 0
      %s24 = sadd.s32 %s23, 1
      %s25 = scalar_select %p22, %s23, %s24
      %p28 = pneg %p22
      %p29 = scmp.eq.s32.totalorder %s13, 1
      %p30 = por %p28, %p29
      %p31 = scmp.ne.s32.totalorder %s23, %s26
      %p32 = scmp.eq.s32.totalorder %s13, 0
      %p33 = por %p31, %p32
      %p34 = scmp.ne.s32.totalorder %s23, %s26
      %p35 = scmp.eq.s32.totalorder %s18, 1
      %p36 = por %p34, %p35
      %p37 = scmp.ne.s32.totalorder %s26, %s27
      %p38 = scmp.eq.s32.totalorder %s18, 0
      %p39 = por %p37, %p38
      %p40 = scmp.ne.s32.totalorder %s26, %s27
      %p41 = scmp.eq.s32.totalorder %s19, 1
      %p42 = por %p40, %p41
      %p44 = scmp.ne.s32.totalorder %s27, %s43
      %p45 = scmp.eq.s32.totalorder %s19, 0
      %p46 = por %p44, %p45
      %s48 = sadd.s32 %s47, 1
      %p51 = scmp.eq.s32.totalorder %s13, 1
      %p52 = scmp.ne.s32.totalorder %s47, %s49
      %p53 = scmp.eq.s32.totalorder %s13, 0
      %p54 = por %p52, %p53
      %p55 = scmp.ne.s32.totalorder %s47, %s49
      %p56 = scmp.eq.s32.totalorder %s18, 1
      %p57 = por %p55, %p56
      %p58 = scmp.ne.s32.totalorder %s49, %s50
      %p59 = scmp.eq.s32.totalorder %s18, 0
      %p60 = por %p58, %p59
      %p61 = scmp.ne.s32.totalorder %s49, %s50
      %p62 = scmp.eq.s32.totalorder %s19, 1
      %p63 = por %p61, %p62
      %p65 = scmp.ne.s32.totalorder %s50, %s64
      %p66 = scmp.eq.s32.totalorder %s19, 0
      %p67 = por %p65, %p66
      %s69 = sadd.s32 %s68, 1
      %p72 = scmp.eq.s32.totalorder %s13, 1
      %p73 = scmp.ne.s32.totalorder %s68, %s70
      %p74 = scmp.eq.s32.totalorder %s13, 0
      %p75 = por %p73, %p74
      %p76 = scmp.ne.s32.totalorder %s68, %s70
      %p77 = scmp.eq.s32.totalorder %s18, 1
      %p78 = por %p76, %p77
      %p79 = scmp.ne.s32.totalorder %s70, %s71
      %p80 = scmp.eq.s32.totalorder %s18, 0
      %p81 = por %p79, %p80
      %p82 = scmp.ne.s32.totalorder %s70, %s71
      %p83 = scmp.eq.s32.totalorder %s19, 1
      %p84 = por %p82, %p83
      %p86 = scmp.ne.s32.totalorder %s71, %s85
      %p87 = scmp.eq.s32.totalorder %s19, 0
      %p88 = por %p86, %p87
      %s90 = sadd.s32 %s89, 1
      %p93 = scmp.eq.s32.totalorder %s13, 1
      %p94 = scmp.ne.s32.totalorder %s89, %s91
      %p95 = scmp.eq.s32.totalorder %s13, 0
      %p96 = por %p94, %p95
      %p97 = scmp.ne.s32.totalorder %s89, %s91
      %p98 = scmp.eq.s32.totalorder %s18, 1
      %p99 = por %p97, %p98
      %p100 = scmp.ne.s32.totalorder %s91, %s92
      %p101 = scmp.eq.s32.totalorder %s18, 0
      %p102 = por %p100, %p101
      %p103 = scmp.ne.s32.totalorder %s91, %s92
      %p104 = scmp.eq.s32.totalorder %s19, 1
      %p105 = por %p103, %p104
      %p107 = scmp.ne.s32.totalorder %s92, %s106
      %p108 = scmp.eq.s32.totalorder %s19, 0
      %p109 = por %p107, %p108
      %s110 = ssub.s32 %s13, %s20
      %p111 = scmp.eq.s32.totalorder %s110, 0
      %s113 = sadd.s32 %s112, 1
      %s114 = scalar_select %p111, %s112, %s113
      %p117 = pneg %p111
      %p118 = scmp.eq.s32.totalorder %s13, 1
      %p119 = por %p117, %p118
      %p120 = scmp.ne.s32.totalorder %s112, %s115
      %p121 = scmp.eq.s32.totalorder %s13, 0
      %p122 = por %p120, %p121
      %p123 = scmp.ne.s32.totalorder %s112, %s115
      %p124 = scmp.eq.s32.totalorder %s18, 1
      %p125 = por %p123, %p124
      %p126 = scmp.ne.s32.totalorder %s115, %s116
      %p127 = scmp.eq.s32.totalorder %s18, 0
      %p128 = por %p126, %p127
      %p129 = scmp.ne.s32.totalorder %s115, %s116
      %p130 = scmp.eq.s32.totalorder %s19, 1
      %p131 = por %p129, %p130
      %p133 = scmp.ne.s32.totalorder %s116, %s132
      %p134 = scmp.eq.s32.totalorder %s19, 0
      %p135 = por %p133, %p134
      %p136 = scmp.le.s32.totalorder 1, %s13
      %p137 = scmp.lt.s32.totalorder %s13, 3
      %p138 = pnand %p136, %p137
      %p139 = pneg %p138
      // Predicated region
      $region9: #{tpu_custom_call.1} parent=5 // pred_check
        _
      $region10: #{tpu_custom_call.1} parent=5 // pred_check_branch
        %141 = sbr.rel (%p138) target = $region12
      $region11: #{tpu_custom_call.1} parent=5 // pred_region
        %s142 = ssub.s32 %s13, 1
        // Predicated region
        $region13: #{tpu_custom_call.1} parent=11 // pred_check
          %p143 = pneg %p60
        $region14: #{tpu_custom_call.1} parent=11 // pred_check_branch
          %145 = sbr.rel (%p143) target = $region16
        $region15: #{tpu_custom_call.1} parent=11 // pred_region
          _
        $region16: #{tpu_custom_call.1} parent=11 // pred_fallthru
          _
        // Predicated region
        $region17: #{tpu_custom_call.1} parent=11 // pred_check
          %p146 = pneg %p81
        $region18: #{tpu_custom_call.1} parent=11 // pred_check_branch
          %148 = sbr.rel (%p146) target = $region20
        $region19: #{tpu_custom_call.1} parent=11 // pred_region
          _
        $region20: #{tpu_custom_call.1} parent=11 // pred_fallthru
          _
        // Predicated region
        $region21: #{tpu_custom_call.1} parent=11 // pred_check
          %p149 = pneg %p102
        $region22: #{tpu_custom_call.1} parent=11 // pred_check_branch
          %151 = sbr.rel (%p149) target = $region24
        $region23: #{tpu_custom_call.1} parent=11 // pred_region
          _
        $region24: #{tpu_custom_call.1} parent=11 // pred_fallthru
          _
      $region12: #{tpu_custom_call.1} parent=5 // pred_fallthru
        _
      %p152 = scmp.lt.s32.totalorder %s13, 2
      // Predicated region
      $region25: #{tpu_custom_call.1} parent=5 // pred_check
        %p153 = pneg %p152
      $region26: #{tpu_custom_call.1} parent=5 // pred_check_branch
        %155 = sbr.rel (%p153) target = $region28
      $region27: #{tpu_custom_call.1} parent=5 // pred_region
        // Predicated region
        $region29: #{tpu_custom_call.1} parent=27 // pred_check
          %p156 = pneg %p33
        $region30: #{tpu_custom_call.1} parent=27 // pred_check_branch
          %158 = sbr.rel (%p156) target = $region32
        $region31: #{tpu_custom_call.1} parent=27 // pred_region
          %p159 = scmp.lt.s32.totalorder %s13, 1
          %s160 = scalar_select %p159, %s13, 1
          %s161 = smul.addr %s160, 2
          %s162 = smul.addr %s161, 4
          %s163 = scalar_lea.vmem %s0, %s162
        $region32: #{tpu_custom_call.1} parent=27 // pred_fallthru
          _
      $region28: #{tpu_custom_call.1} parent=5 // pred_fallthru
        _
      %p164 = scmp.le.s32.totalorder 1, %s13
      %p165 = scmp.lt.s32.totalorder %s13, 3
      %p166 = pnand %p164, %p165
      %p167 = pneg %p166
      // Predicated region
      $region33: #{tpu_custom_call.1} parent=5 // pred_check
        _
      $region34: #{tpu_custom_call.1} parent=5 // pred_check_branch
        %169 = sbr.rel (%p166) target = $region36
      $region35: #{tpu_custom_call.1} parent=5 // pred_region
        %s170 = ssub.s32 %s13, 1
        %p171 = scmp.lt.s32.totalorder %s18, 1
        %s172 = scalar_select %p171, %s18, 1
        %s173 = smul.addr %s172, 2
        %s174 = smul.addr %s173, 4
        %s175 = scalar_lea.vmem %s0, %s174
        %p176 = pneg %p39
        %p177 = pneg %p36
        %p178 = pneg %p60
        %p179 = pneg %p57
        %p180 = pneg %p81
        %p181 = pneg %p78
        %p182 = pneg %p102
        %p183 = pneg %p99
        %p184 = pneg %p128
        %p185 = pneg %p125
        %s186 = sand.u32 %s115, 1
        %s187 = scalar_lea.sflag [#allocation3], %s186
        %s188 = sand.u32 %s115, 1
        %s189 = smul.addr %s188, 64
        %s190 = scalar_lea.vmem [#allocation2], %s189
        %p191 = scmp.lt.s32.totalorder %s18, 1
        %s192 = scalar_select %p191, %s18, 1
        %s193 = smul.addr %s192, 2
        %s194 = smul.addr %s193, 4
        %s195 = scalar_lea.vmem %s0, %s194
        %v196 = vld [vmem:[%s195] sm:$0xff]
        %v197 = vld [vmem:[%s1] sm:$0xff]
        %v198 = vld [vmem:[%s1 + $0x8] sm:$0xff]
        %v199 = vld [vmem:[%s1 + $0x10] sm:$0xff]
        %v200 = vld [vmem:[%s1 + $0x18] sm:$0xff]
        %v202 = vcombine.high %v196, %v196
        %vm203 = vcmask 31744
        %v205 = vsel %vm203, %v197, 0
        %v208 = vsel %vm203, %v198, 0
        %v211 = vsel %vm203, %v199, 0
        %v214 = vsel %vm203, %v200, 0
        %vm216 = vcmask 1043456
        %v217 = vsel %vm216, %v196, 0
        %v219 = vsel %vm216, %v202, 0
        %v221 = vand.u32 %v219, 4294901760
        %222 = vmatprep.subr.mxu0 %v221
        %v223 = vand.u32 %v217, 4294901760
        %224 = vmatpush1.msra.mxu0 %v223
        %225 = vmatprep.subr.mxu0 0.0
        %226 = vmatpush1.msra.mxu0 0.0
        %227 = vmatprep.subr.mxu0 0.0
        %228 = vmatpush1.msra.mxu0 0.0
        %229 = vmatprep.subr.mxu0 0.0
        %230 = vmatpush1.msra.mxu0 0.0
        %231 = vmatprep.subr.mxu0 0.0
        %232 = vmatpush1.msra.mxu0 0.0
        %233 = vmatprep.subr.mxu0 0.0
        %234 = vmatpush1.msra.mxu0 0.0
        %235 = vmatprep.subr.mxu0 0.0
        %236 = vmatpush1.msra.mxu0 0.0
        %237 = vmatprep.subr.mxu0 0.0
        %238 = vmatpush1.msra.mxu0 0.0
        %239 = vmatprep.subr.mxu0 0.0
        %240 = vmatpush1.msra.mxu0 0.0
        %241 = vmatprep.subr.mxu0 0.0
        %242 = vmatpush1.msra.mxu0 0.0
        %243 = vmatprep.subr.mxu0 0.0
        %244 = vmatpush1.msra.mxu0 0.0
        %245 = vmatprep.subr.mxu0 0.0
        %246 = vmatpush1.msra.mxu0 0.0
        %247 = vmatprep.subr.mxu0 0.0
        %248 = vmatpush1.msra.mxu0 0.0
        %249 = vmatprep.subr.mxu0 0.0
        %250 = vmatpush1.msra.mxu0 0.0
        %251 = vmatprep.subr.mxu0 0.0
        %252 = vmatpush1.msra.mxu0 0.0
        %253 = vmatprep.subr.mxu0 0.0
        %254 = vmatpush1.msra.mxu0 0.0
        %255 = vmatprep.subr.mxu0 0.0
        %256 = vmatpush1.msra.mxu0 0.0
        %257 = vmatprep.subr.mxu0 0.0
        %258 = vmatpush1.msra.mxu0 0.0
        %259 = vmatprep.subr.mxu0 0.0
        %260 = vmatpush1.msra.mxu0 0.0
        %261 = vmatprep.subr.mxu0 0.0
        %262 = vmatpush1.msra.mxu0 0.0
        %263 = vmatprep.subr.mxu0 0.0
        %264 = vmatpush1.msra.mxu0 0.0
        %265 = vmatprep.subr.mxu0 0.0
        %266 = vmatpush1.msra.mxu0 0.0
        %267 = vmatprep.subr.mxu0 0.0
        %268 = vmatpush1.msra.mxu0 0.0
        %269 = vmatprep.subr.mxu0 0.0
        %270 = vmatpush1.msra.mxu0 0.0
        %271 = vmatprep.subr.mxu0 0.0
        %272 = vmatpush1.msra.mxu0 0.0
        %273 = vmatprep.subr.mxu0 0.0
        %274 = vmatpush1.msra.mxu0 0.0
        %275 = vmatprep.subr.mxu0 0.0
        %276 = vmatpush1.msra.mxu0 0.0
        %277 = vmatprep.subr.mxu0 0.0
        %278 = vmatpush1.msra.mxu0 0.0
        %279 = vmatprep.subr.mxu0 0.0
        %280 = vmatpush1.msra.mxu0 0.0
        %281 = vmatprep.subr.mxu0 0.0
        %282 = vmatpush1.msra.mxu0 0.0
        %283 = vmatprep.subr.mxu0 0.0
        %284 = vmatpush1.msra.mxu0 0.0
        %285 = vmatprep.subr.mxu0 0.0
        %286 = vmatpush1.msra.mxu0 0.0
        %287 = vmatprep.mubr.f32.mxu0 0.0
        %v288 = vand.u32 %v205, 4294901760
        %v289 = vsub.f32 %v205, %v288
        %v290 = vand.u32 %v289, 4294901760
        %v291 = vsub.f32 %v289, %v290
        %v292 = vand.u32 %v291, 4294901760
        %293 = vmatmul.mubr.f32.gmra.mrb[0].mxu0 %v292
        %v294 = vpop.f32.mrb[0].mxu0
        %v295 = vadd.f32 0.0, %v294
        %v296 = vpop.f32.mrb[0].mxu0
        %v297 = vadd.f32 0.0, %v296
        %298 = vmatprep.mubr.f32.mxu0 0.0
        %v299 = vand.u32 %v208, 4294901760
        %v300 = vsub.f32 %v208, %v299
        %v301 = vand.u32 %v300, 4294901760
        %v302 = vsub.f32 %v300, %v301
        %v303 = vand.u32 %v302, 4294901760
        %304 = vmatmul.mubr.f32.gmra.mrb[0].mxu0 %v303
        %v305 = vpop.f32.mrb[0].mxu0
        %v306 = vadd.f32 0.0, %v305
        %v307 = vpop.f32.mrb[0].mxu0
        %v308 = vadd.f32 0.0, %v307
        %309 = vmatprep.mubr.f32.mxu0 0.0
        %v310 = vand.u32 %v211, 4294901760
        %v311 = vsub.f32 %v211, %v310
        %v312 = vand.u32 %v311, 4294901760
        %v313 = vsub.f32 %v311, %v312
        %v314 = vand.u32 %v313, 4294901760
        %315 = vmatmul.mubr.f32.gmra.mrb[0].mxu0 %v314
        %v316 = vpop.f32.mrb[0].mxu0
        %v317 = vadd.f32 0.0, %v316
        %v318 = vpop.f32.mrb[0].mxu0
        %v319 = vadd.f32 0.0, %v318
        %320 = vmatprep.mubr.f32.mxu0 0.0
        %v321 = vand.u32 %v214, 4294901760
        %v322 = vsub.f32 %v214, %v321
        %v323 = vand.u32 %v322, 4294901760
        %v324 = vsub.f32 %v322, %v323
        %v325 = vand.u32 %v324, 4294901760
        %326 = vmatmul.mubr.f32.gmra.mrb[0].mxu0 %v325
        %v327 = vpop.f32.mrb[0].mxu0
        %v328 = vadd.f32 0.0, %v327
        %v329 = vpop.f32.mrb[0].mxu0
        %v330 = vadd.f32 0.0, %v329
        %331 = vdwg.mxu0
        %v332 = vand.u32 %v219, 4294901760
        %v333 = vsub.f32 %v219, %v332
        %v334 = vand.u32 %v333, 4294901760
        %v335 = vsub.f32 %v333, %v334
        %v336 = vand.u32 %v335, 4294901760
        %337 = vmatprep.subr.mxu0 %v336
        %v338 = vand.u32 %v217, 4294901760
        %v339 = vsub.f32 %v217, %v338
        %v340 = vand.u32 %v339, 4294901760
        %v341 = vsub.f32 %v339, %v340
        %v342 = vand.u32 %v341, 4294901760
        %343 = vmatpush1.msra.mxu0 %v342
        %344 = vmatprep.subr.mxu0 0.0
        %345 = vmatpush1.msra.mxu0 0.0
        %346 = vmatprep.subr.mxu0 0.0
        %347 = vmatpush1.msra.mxu0 0.0
        %348 = vmatprep.subr.mxu0 0.0
        %349 = vmatpush1.msra.mxu0 0.0
        %350 = vmatprep.subr.mxu0 0.0
        %351 = vmatpush1.msra.mxu0 0.0
        %352 = vmatprep.subr.mxu0 0.0
        %353 = vmatpush1.msra.mxu0 0.0
        %354 = vmatprep.subr.mxu0 0.0
        %355 = vmatpush1.msra.mxu0 0.0
        %356 = vmatprep.subr.mxu0 0.0
        %357 = vmatpush1.msra.mxu0 0.0
        %358 = vmatprep.subr.mxu0 0.0
        %359 = vmatpush1.msra.mxu0 0.0
        %360 = vmatprep.subr.mxu0 0.0
        %361 = vmatpush1.msra.mxu0 0.0
        %362 = vmatprep.subr.mxu0 0.0
        %363 = vmatpush1.msra.mxu0 0.0
        %364 = vmatprep.subr.mxu0 0.0
        %365 = vmatpush1.msra.mxu0 0.0
        %366 = vmatprep.subr.mxu0 0.0
        %367 = vmatpush1.msra.mxu0 0.0
        %368 = vmatprep.subr.mxu0 0.0
        %369 = vmatpush1.msra.mxu0 0.0
        %370 = vmatprep.subr.mxu0 0.0
        %371 = vmatpush1.msra.mxu0 0.0
        %372 = vmatprep.subr.mxu0 0.0
        %373 = vmatpush1.msra.mxu0 0.0
        %374 = vmatprep.subr.mxu0 0.0
        %375 = vmatpush1.msra.mxu0 0.0
        %376 = vmatprep.subr.mxu0 0.0
        %377 = vmatpush1.msra.mxu0 0.0
        %378 = vmatprep.subr.mxu0 0.0
        %379 = vmatpush1.msra.mxu0 0.0
        %380 = vmatprep.subr.mxu0 0.0
        %381 = vmatpush1.msra.mxu0 0.0
        %382 = vmatprep.subr.mxu0 0.0
        %383 = vmatpush1.msra.mxu0 0.0
        %384 = vmatprep.subr.mxu0 0.0
        %385 = vmatpush1.msra.mxu0 0.0
        %386 = vmatprep.subr.mxu0 0.0
        %387 = vmatpush1.msra.mxu0 0.0
        %388 = vmatprep.subr.mxu0 0.0
        %389 = vmatpush1.msra.mxu0 0.0
        %390 = vmatprep.subr.mxu0 0.0
        %391 = vmatpush1.msra.mxu0 0.0
        %392 = vmatprep.subr.mxu0 0.0
        %393 = vmatpush1.msra.mxu0 0.0
        %394 = vmatprep.subr.mxu0 0.0
        %395 = vmatpush1.msra.mxu0 0.0
        %396 = vmatprep.subr.mxu0 0.0
        %397 = vmatpush1.msra.mxu0 0.0
        %398 = vmatprep.subr.mxu0 0.0
        %399 = vmatpush1.msra.mxu0 0.0
        %400 = vmatprep.subr.mxu0 0.0
        %401 = vmatpush1.msra.mxu0 0.0
        %402 = vmatprep.subr.mxu0 0.0
        %403 = vmatpush1.msra.mxu0 0.0
        %404 = vmatprep.subr.mxu0 0.0
        %405 = vmatpush1.msra.mxu0 0.0
        %406 = vmatprep.mubr.f32.mxu0 0.0
        %v407 = vand.u32 %v205, 4294901760
        %408 = vmatmul.mubr.f32.gmra.mrb[0].mxu0 %v407
        %v409 = vpop.f32.mrb[0].mxu0
        %v410 = vadd.f32 %v295, %v409
        %v411 = vpop.f32.mrb[0].mxu0
        %v412 = vadd.f32 %v297, %v411
        %413 = vmatprep.mubr.f32.mxu0 0.0
        %v414 = vand.u32 %v208, 4294901760
        %415 = vmatmul.mubr.f32.gmra.mrb[0].mxu0 %v414
        %v416 = vpop.f32.mrb[0].mxu0
        %v417 = vadd.f32 %v306, %v416
        %v418 = vpop.f32.mrb[0].mxu0
        %v419 = vadd.f32 %v308, %v418
        %420 = vmatprep.mubr.f32.mxu0 0.0
        %v421 = vand.u32 %v211, 4294901760
        %422 = vmatmul.mubr.f32.gmra.mrb[0].mxu0 %v421
        %v423 = vpop.f32.mrb[0].mxu0
        %v424 = vadd.f32 %v317, %v423
        %v425 = vpop.f32.mrb[0].mxu0
        %v426 = vadd.f32 %v319, %v425
        %427 = vmatprep.mubr.f32.mxu0 0.0
        %v428 = vand.u32 %v214, 4294901760
        %429 = vmatmul.mubr.f32.gmra.mrb[0].mxu0 %v428
        %v430 = vpop.f32.mrb[0].mxu0
        %v431 = vadd.f32 %v328, %v430
        %v432 = vpop.f32.mrb[0].mxu0
        %v433 = vadd.f32 %v330, %v432
        %434 = vdwg.mxu0
        %v435 = vand.u32 %v219, 4294901760
        %v436 = vsub.f32 %v219, %v435
        %437 = vmatprep.subr.mxu0 %v436
        %v438 = vand.u32 %v217, 4294901760
        %v439 = vsub.f32 %v217, %v438
        %440 = vmatpush1.msra.mxu0 %v439
        %441 = vmatprep.subr.mxu0 0.0
        %442 = vmatpush1.msra.mxu0 0.0
        %443 = vmatprep.subr.mxu0 0.0
        %444 = vmatpush1.msra.mxu0 0.0
        %445 = vmatprep.subr.mxu0 0.0
        %446 = vmatpush1.msra.mxu0 0.0
        %447 = vmatprep.subr.mxu0 0.0
        %448 = vmatpush1.msra.mxu0 0.0
        %449 = vmatprep.subr.mxu0 0.0
        %450 = vmatpush1.msra.mxu0 0.0
        %451 = vmatprep.subr.mxu0 0.0
        %452 = vmatpush1.msra.mxu0 0.0
        %453 = vmatprep.subr.mxu0 0.0
        %454 = vmatpush1.msra.mxu0 0.0
        %455 = vmatprep.subr.mxu0 0.0
        %456 = vmatpush1.msra.mxu0 0.0
        %457 = vmatprep.subr.mxu0 0.0
        %458 = vmatpush1.msra.mxu0 0.0
        %459 = vmatprep.subr.mxu0 0.0
        %460 = vmatpush1.msra.mxu0 0.0
        %461 = vmatprep.subr.mxu0 0.0
        %462 = vmatpush1.msra.mxu0 0.0
        %463 = vmatprep.subr.mxu0 0.0
        %464 = vmatpush1.msra.mxu0 0.0
        %465 = vmatprep.subr.mxu0 0.0
        %466 = vmatpush1.msra.mxu0 0.0
        %467 = vmatprep.subr.mxu0 0.0
        %468 = vmatpush1.msra.mxu0 0.0
        %469 = vmatprep.subr.mxu0 0.0
        %470 = vmatpush1.msra.mxu0 0.0
        %471 = vmatprep.subr.mxu0 0.0
        %472 = vmatpush1.msra.mxu0 0.0
        %473 = vmatprep.subr.mxu0 0.0
        %474 = vmatpush1.msra.mxu0 0.0
        %475 = vmatprep.subr.mxu0 0.0
        %476 = vmatpush1.msra.mxu0 0.0
        %477 = vmatprep.subr.mxu0 0.0
        %478 = vmatpush1.msra.mxu0 0.0
        %479 = vmatprep.subr.mxu0 0.0
        %480 = vmatpush1.msra.mxu0 0.0
        %481 = vmatprep.subr.mxu0 0.0
        %482 = vmatpush1.msra.mxu0 0.0
        %483 = vmatprep.subr.mxu0 0.0
        %484 = vmatpush1.msra.mxu0 0.0
        %485 = vmatprep.subr.mxu0 0.0
        %486 = vmatpush1.msra.mxu0 0.0
        %487 = vmatprep.subr.mxu0 0.0
        %488 = vmatpush1.msra.mxu0 0.0
        %489 = vmatprep.subr.mxu0 0.0
        %490 = vmatpush1.msra.mxu0 0.0
        %491 = vmatprep.subr.mxu0 0.0
        %492 = vmatpush1.msra.mxu0 0.0
        %493 = vmatprep.subr.mxu0 0.0
        %494 = vmatpush1.msra.mxu0 0.0
        %495 = vmatprep.subr.mxu0 0.0
        %496 = vmatpush1.msra.mxu0 0.0
        %497 = vmatprep.subr.mxu0 0.0
        %498 = vmatpush1.msra.mxu0 0.0
        %499 = vmatprep.subr.mxu0 0.0
        %500 = vmatpush1.msra.mxu0 0.0
        %501 = vmatprep.subr.mxu0 0.0
        %502 = vmatpush1.msra.mxu0 0.0
        %503 = vmatprep.mubr.f32.mxu0 0.0
        %v504 = vand.u32 %v205, 4294901760
        %v505 = vsub.f32 %v205, %v504
        %506 = vmatmul.mubr.f32.gmra.mrb[0].mxu0 %v505
        %v507 = vpop.f32.mrb[0].mxu0
        %v508 = vadd.f32 %v410, %v507
        %v509 = vpop.f32.mrb[0].mxu0
        %v510 = vadd.f32 %v412, %v509
        %511 = vmatprep.mubr.f32.mxu0 0.0
        %v512 = vand.u32 %v208, 4294901760
        %v513 = vsub.f32 %v208, %v512
        %514 = vmatmul.mubr.f32.gmra.mrb[0].mxu0 %v513
        %v515 = vpop.f32.mrb[0].mxu0
        %v516 = vadd.f32 %v417, %v515
        %v517 = vpop.f32.mrb[0].mxu0
        %v518 = vadd.f32 %v419, %v517
        %519 = vmatprep.mubr.f32.mxu0 0.0
        %v520 = vand.u32 %v211, 4294901760
        %v521 = vsub.f32 %v211, %v520
        %522 = vmatmul.mubr.f32.gmra.mrb[0].mxu0 %v521
        %v523 = vpop.f32.mrb[0].mxu0
        %v524 = vadd.f32 %v424, %v523
        %v525 = vpop.f32.mrb[0].mxu0
        %v526 = vadd.f32 %v426, %v525
        %527 = vmatprep.mubr.f32.mxu0 0.0
        %v528 = vand.u32 %v214, 4294901760
        %v529 = vsub.f32 %v214, %v528
        %530 = vmatmul.mubr.f32.gmra.mrb[0].mxu0 %v529
        %v531 = vpop.f32.mrb[0].mxu0
        %v532 = vadd.f32 %v431, %v531
        %v533 = vpop.f32.mrb[0].mxu0
        %v534 = vadd.f32 %v433, %v533
        %535 = vdwg.mxu0
        %v536 = vand.u32 %v219, 4294901760
        %537 = vmatprep.subr.mxu0 %v536
        %v538 = vand.u32 %v217, 4294901760
        %539 = vmatpush1.msra.mxu0 %v538
        %540 = vmatprep.subr.mxu0 0.0
        %541 = vmatpush1.msra.mxu0 0.0
        %542 = vmatprep.subr.mxu0 0.0
        %543 = vmatpush1.msra.mxu0 0.0
        %544 = vmatprep.subr.mxu0 0.0
        %545 = vmatpush1.msra.mxu0 0.0
        %546 = vmatprep.subr.mxu0 0.0
        %547 = vmatpush1.msra.mxu0 0.0
        %548 = vmatprep.subr.mxu0 0.0
        %549 = vmatpush1.msra.mxu0 0.0
        %550 = vmatprep.subr.mxu0 0.0
        %551 = vmatpush1.msra.mxu0 0.0
        %552 = vmatprep.subr.mxu0 0.0
        %553 = vmatpush1.msra.mxu0 0.0
        %554 = vmatprep.subr.mxu0 0.0
        %555 = vmatpush1.msra.mxu0 0.0
        %556 = vmatprep.subr.mxu0 0.0
        %557 = vmatpush1.msra.mxu0 0.0
        %558 = vmatprep.subr.mxu0 0.0
        %559 = vmatpush1.msra.mxu0 0.0
        %560 = vmatprep.subr.mxu0 0.0
        %561 = vmatpush1.msra.mxu0 0.0
        %562 = vmatprep.subr.mxu0 0.0
        %563 = vmatpush1.msra.mxu0 0.0
        %564 = vmatprep.subr.mxu0 0.0
        %565 = vmatpush1.msra.mxu0 0.0
        %566 = vmatprep.subr.mxu0 0.0
        %567 = vmatpush1.msra.mxu0 0.0
        %568 = vmatprep.subr.mxu0 0.0
        %569 = vmatpush1.msra.mxu0 0.0
        %570 = vmatprep.subr.mxu0 0.0
        %571 = vmatpush1.msra.mxu0 0.0
        %572 = vmatprep.subr.mxu0 0.0
        %573 = vmatpush1.msra.mxu0 0.0
        %574 = vmatprep.subr.mxu0 0.0
        %575 = vmatpush1.msra.mxu0 0.0
        %576 = vmatprep.subr.mxu0 0.0
        %577 = vmatpush1.msra.mxu0 0.0
        %578 = vmatprep.subr.mxu0 0.0
        %579 = vmatpush1.msra.mxu0 0.0
        %580 = vmatprep.subr.mxu0 0.0
        %581 = vmatpush1.msra.mxu0 0.0
        %582 = vmatprep.subr.mxu0 0.0
        %583 = vmatpush1.msra.mxu0 0.0
        %584 = vmatprep.subr.mxu0 0.0
        %585 = vmatpush1.msra.mxu0 0.0
        %586 = vmatprep.subr.mxu0 0.0
        %587 = vmatpush1.msra.mxu0 0.0
        %588 = vmatprep.subr.mxu0 0.0
        %589 = vmatpush1.msra.mxu0 0.0
        %590 = vmatprep.subr.mxu0 0.0
        %591 = vmatpush1.msra.mxu0 0.0
        %592 = vmatprep.subr.mxu0 0.0
        %593 = vmatpush1.msra.mxu0 0.0
        %594 = vmatprep.subr.mxu0 0.0
        %595 = vmatpush1.msra.mxu0 0.0
        %596 = vmatprep.subr.mxu0 0.0
        %597 = vmatpush1.msra.mxu0 0.0
        %598 = vmatprep.subr.mxu0 0.0
        %599 = vmatpush1.msra.mxu0 0.0
        %600 = vmatprep.subr.mxu0 0.0
        %601 = vmatpush1.msra.mxu0 0.0
        %602 = vmatprep.mubr.f32.mxu0 0.0
        %v603 = vand.u32 %v205, 4294901760
        %v604 = vsub.f32 %v205, %v603
        %v605 = vand.u32 %v604, 4294901760
        %606 = vmatmul.mubr.f32.gmra.mrb[0].mxu0 %v605
        %v607 = vpop.f32.mrb[0].mxu0
        %v608 = vadd.f32 %v508, %v607
        %v609 = vpop.f32.mrb[0].mxu0
        %v610 = vadd.f32 %v510, %v609
        %611 = vmatprep.mubr.f32.mxu0 0.0
        %v612 = vand.u32 %v208, 4294901760
        %v613 = vsub.f32 %v208, %v612
        %v614 = vand.u32 %v613, 4294901760
        %615 = vmatmul.mubr.f32.gmra.mrb[0].mxu0 %v614
        %v616 = vpop.f32.mrb[0].mxu0
        %v617 = vadd.f32 %v516, %v616
        %v618 = vpop.f32.mrb[0].mxu0
        %v619 = vadd.f32 %v518, %v618
        %620 = vmatprep.mubr.f32.mxu0 0.0
        %v621 = vand.u32 %v211, 4294901760
        %v622 = vsub.f32 %v211, %v621
        %v623 = vand.u32 %v622, 4294901760
        %624 = vmatmul.mubr.f32.gmra.mrb[0].mxu0 %v623
        %v625 = vpop.f32.mrb[0].mxu0
        %v626 = vadd.f32 %v524, %v625
        %v627 = vpop.f32.mrb[0].mxu0
        %v628 = vadd.f32 %v526, %v627
        %629 = vmatprep.mubr.f32.mxu0 0.0
        %v630 = vand.u32 %v214, 4294901760
        %v631 = vsub.f32 %v214, %v630
        %v632 = vand.u32 %v631, 4294901760
        %633 = vmatmul.mubr.f32.gmra.mrb[0].mxu0 %v632
        %v634 = vpop.f32.mrb[0].mxu0
        %v635 = vadd.f32 %v532, %v634
        %v636 = vpop.f32.mrb[0].mxu0
        %v637 = vadd.f32 %v534, %v636
        %638 = vdwg.mxu0
        %v639 = vand.u32 %v219, 4294901760
        %v640 = vsub.f32 %v219, %v639
        %v641 = vand.u32 %v640, 4294901760
        %642 = vmatprep.subr.mxu0 %v641
        %v643 = vand.u32 %v217, 4294901760
        %v644 = vsub.f32 %v217, %v643
        %v645 = vand.u32 %v644, 4294901760
        %646 = vmatpush1.msra.mxu0 %v645
        %647 = vmatprep.subr.mxu0 0.0
        %648 = vmatpush1.msra.mxu0 0.0
        %649 = vmatprep.subr.mxu0 0.0
        %650 = vmatpush1.msra.mxu0 0.0
        %651 = vmatprep.subr.mxu0 0.0
        %652 = vmatpush1.msra.mxu0 0.0
        %653 = vmatprep.subr.mxu0 0.0
        %654 = vmatpush1.msra.mxu0 0.0
        %655 = vmatprep.subr.mxu0 0.0
        %656 = vmatpush1.msra.mxu0 0.0
        %657 = vmatprep.subr.mxu0 0.0
        %658 = vmatpush1.msra.mxu0 0.0
        %659 = vmatprep.subr.mxu0 0.0
        %660 = vmatpush1.msra.mxu0 0.0
        %661 = vmatprep.subr.mxu0 0.0
        %662 = vmatpush1.msra.mxu0 0.0
        %663 = vmatprep.subr.mxu0 0.0
        %664 = vmatpush1.msra.mxu0 0.0
        %665 = vmatprep.subr.mxu0 0.0
        %666 = vmatpush1.msra.mxu0 0.0
        %667 = vmatprep.subr.mxu0 0.0
        %668 = vmatpush1.msra.mxu0 0.0
        %669 = vmatprep.subr.mxu0 0.0
        %670 = vmatpush1.msra.mxu0 0.0
        %671 = vmatprep.subr.mxu0 0.0
        %672 = vmatpush1.msra.mxu0 0.0
        %673 = vmatprep.subr.mxu0 0.0
        %674 = vmatpush1.msra.mxu0 0.0
        %675 = vmatprep.subr.mxu0 0.0
        %676 = vmatpush1.msra.mxu0 0.0
        %677 = vmatprep.subr.mxu0 0.0
        %678 = vmatpush1.msra.mxu0 0.0
        %679 = vmatprep.subr.mxu0 0.0
        %680 = vmatpush1.msra.mxu0 0.0
        %681 = vmatprep.subr.mxu0 0.0
        %682 = vmatpush1.msra.mxu0 0.0
        %683 = vmatprep.subr.mxu0 0.0
        %684 = vmatpush1.msra.mxu0 0.0
        %685 = vmatprep.subr.mxu0 0.0
        %686 = vmatpush1.msra.mxu0 0.0
        %687 = vmatprep.subr.mxu0 0.0
        %688 = vmatpush1.msra.mxu0 0.0
        %689 = vmatprep.subr.mxu0 0.0
        %690 = vmatpush1.msra.mxu0 0.0
        %691 = vmatprep.subr.mxu0 0.0
        %692 = vmatpush1.msra.mxu0 0.0
        %693 = vmatprep.subr.mxu0 0.0
        %694 = vmatpush1.msra.mxu0 0.0
        %695 = vmatprep.subr.mxu0 0.0
        %696 = vmatpush1.msra.mxu0 0.0
        %697 = vmatprep.subr.mxu0 0.0
        %698 = vmatpush1.msra.mxu0 0.0
        %699 = vmatprep.subr.mxu0 0.0
        %700 = vmatpush1.msra.mxu0 0.0
        %701 = vmatprep.subr.mxu0 0.0
        %702 = vmatpush1.msra.mxu0 0.0
        %703 = vmatprep.subr.mxu0 0.0
        %704 = vmatpush1.msra.mxu0 0.0
        %705 = vmatprep.subr.mxu0 0.0
        %706 = vmatpush1.msra.mxu0 0.0
        %707 = vmatprep.subr.mxu0 0.0
        %708 = vmatpush1.msra.mxu0 0.0
        %709 = vmatprep.mubr.f32.mxu0 0.0
        %v710 = vand.u32 %v205, 4294901760
        %711 = vmatmul.mubr.f32.gmra.mrb[0].mxu0 %v710
        %v712 = vpop.f32.mrb[0].mxu0
        %v713 = vadd.f32 %v608, %v712
        %v714 = vpop.f32.mrb[0].mxu0
        %v715 = vadd.f32 %v610, %v714
        %716 = vmatprep.mubr.f32.mxu0 0.0
        %v717 = vand.u32 %v208, 4294901760
        %718 = vmatmul.mubr.f32.gmra.mrb[0].mxu0 %v717
        %v719 = vpop.f32.mrb[0].mxu0
        %v720 = vadd.f32 %v617, %v719
        %v721 = vpop.f32.mrb[0].mxu0
        %v722 = vadd.f32 %v619, %v721
        %723 = vmatprep.mubr.f32.mxu0 0.0
        %v724 = vand.u32 %v211, 4294901760
        %725 = vmatmul.mubr.f32.gmra.mrb[0].mxu0 %v724
        %v726 = vpop.f32.mrb[0].mxu0
        %v727 = vadd.f32 %v626, %v726
        %v728 = vpop.f32.mrb[0].mxu0
        %v729 = vadd.f32 %v628, %v728
        %730 = vmatprep.mubr.f32.mxu0 0.0
        %v731 = vand.u32 %v214, 4294901760
        %732 = vmatmul.mubr.f32.gmra.mrb[0].mxu0 %v731
        %v733 = vpop.f32.mrb[0].mxu0
        %v734 = vadd.f32 %v635, %v733
        %v735 = vpop.f32.mrb[0].mxu0
        %v736 = vadd.f32 %v637, %v735
        %737 = vdwg.mxu0
        %v738 = vand.u32 %v219, 4294901760
        %739 = vmatprep.subr.mxu0 %v738
        %v740 = vand.u32 %v217, 4294901760
        %741 = vmatpush1.msra.mxu0 %v740
        %742 = vmatprep.subr.mxu0 0.0
        %743 = vmatpush1.msra.mxu0 0.0
        %744 = vmatprep.subr.mxu0 0.0
        %745 = vmatpush1.msra.mxu0 0.0
        %746 = vmatprep.subr.mxu0 0.0
        %747 = vmatpush1.msra.mxu0 0.0
        %748 = vmatprep.subr.mxu0 0.0
        %749 = vmatpush1.msra.mxu0 0.0
        %750 = vmatprep.subr.mxu0 0.0
        %751 = vmatpush1.msra.mxu0 0.0
        %752 = vmatprep.subr.mxu0 0.0
        %753 = vmatpush1.msra.mxu0 0.0
        %754 = vmatprep.subr.mxu0 0.0
        %755 = vmatpush1.msra.mxu0 0.0
        %756 = vmatprep.subr.mxu0 0.0
        %757 = vmatpush1.msra.mxu0 0.0
        %758 = vmatprep.subr.mxu0 0.0
        %759 = vmatpush1.msra.mxu0 0.0
        %760 = vmatprep.subr.mxu0 0.0
        %761 = vmatpush1.msra.mxu0 0.0
        %762 = vmatprep.subr.mxu0 0.0
        %763 = vmatpush1.msra.mxu0 0.0
        %764 = vmatprep.subr.mxu0 0.0
        %765 = vmatpush1.msra.mxu0 0.0
        %766 = vmatprep.subr.mxu0 0.0
        %767 = vmatpush1.msra.mxu0 0.0
        %768 = vmatprep.subr.mxu0 0.0
        %769 = vmatpush1.msra.mxu0 0.0
        %770 = vmatprep.subr.mxu0 0.0
        %771 = vmatpush1.msra.mxu0 0.0
        %772 = vmatprep.subr.mxu0 0.0
        %773 = vmatpush1.msra.mxu0 0.0
        %774 = vmatprep.subr.mxu0 0.0
        %775 = vmatpush1.msra.mxu0 0.0
        %776 = vmatprep.subr.mxu0 0.0
        %777 = vmatpush1.msra.mxu0 0.0
        %778 = vmatprep.subr.mxu0 0.0
        %779 = vmatpush1.msra.mxu0 0.0
        %780 = vmatprep.subr.mxu0 0.0
        %781 = vmatpush1.msra.mxu0 0.0
        %782 = vmatprep.subr.mxu0 0.0
        %783 = vmatpush1.msra.mxu0 0.0
        %784 = vmatprep.subr.mxu0 0.0
        %785 = vmatpush1.msra.mxu0 0.0
        %786 = vmatprep.subr.mxu0 0.0
        %787 = vmatpush1.msra.mxu0 0.0
        %788 = vmatprep.subr.mxu0 0.0
        %789 = vmatpush1.msra.mxu0 0.0
        %790 = vmatprep.subr.mxu0 0.0
        %791 = vmatpush1.msra.mxu0 0.0
        %792 = vmatprep.subr.mxu0 0.0
        %793 = vmatpush1.msra.mxu0 0.0
        %794 = vmatprep.subr.mxu0 0.0
        %795 = vmatpush1.msra.mxu0 0.0
        %796 = vmatprep.subr.mxu0 0.0
        %797 = vmatpush1.msra.mxu0 0.0
        %798 = vmatprep.subr.mxu0 0.0
        %799 = vmatpush1.msra.mxu0 0.0
        %800 = vmatprep.subr.mxu0 0.0
        %801 = vmatpush1.msra.mxu0 0.0
        %802 = vmatprep.subr.mxu0 0.0
        %803 = vmatpush1.msra.mxu0 0.0
        %804 = vmatprep.mubr.f32.mxu0 0.0
        %v805 = vand.u32 %v205, 4294901760
        %806 = vmatmul.mubr.f32.gmra.mrb[0].mxu0 %v805
        %v807 = vpop.f32.mrb[0].mxu0
        %v808 = vadd.f32 %v713, %v807
        %v809 = vpop.f32.mrb[0].mxu0
        %v810 = vadd.f32 %v715, %v809
        %811 = vmatprep.mubr.f32.mxu0 0.0
        %v812 = vand.u32 %v208, 4294901760
        %813 = vmatmul.mubr.f32.gmra.mrb[0].mxu0 %v812
        %v814 = vpop.f32.mrb[0].mxu0
        %v815 = vadd.f32 %v720, %v814
        %v816 = vpop.f32.mrb[0].mxu0
        %v817 = vadd.f32 %v722, %v816
        %818 = vmatprep.mubr.f32.mxu0 0.0
        %v819 = vand.u32 %v211, 4294901760
        %820 = vmatmul.mubr.f32.gmra.mrb[0].mxu0 %v819
        %v821 = vpop.f32.mrb[0].mxu0
        %v822 = vadd.f32 %v727, %v821
        %v823 = vpop.f32.mrb[0].mxu0
        %v824 = vadd.f32 %v729, %v823
        %825 = vmatprep.mubr.f32.mxu0 0.0
        %v826 = vand.u32 %v214, 4294901760
        %827 = vmatmul.mubr.f32.gmra.mrb[0].mxu0 %v826
        %v828 = vpop.f32.mrb[0].mxu0
        %v829 = vadd.f32 %v734, %v828
        %v830 = vpop.f32.mrb[0].mxu0
        %v831 = vadd.f32 %v736, %v830
        %832 = vdwg.mxu0
        %v833 = vld [vmem:[%s2] sm:$0xff]
        %v834 = vld [vmem:[%s2 + $0x8] sm:$0xff]
        %v835 = vld [vmem:[%s2 + $0x10] sm:$0xff]
        %v836 = vld [vmem:[%s2 + $0x18] sm:$0xff]
        %838 = vset.pattern.permute.xlu0 0
        %839 = vperm.xlu0 %838, %v833
        %v840 = vpop.permute.xlu0 %839
        %843 = vset.pattern.permute.xlu0 0
        %844 = vperm.xlu0 %843, %v834
        %v845 = vpop.permute.xlu0 %844
        %848 = vset.pattern.permute.xlu0 0
        %849 = vperm.xlu0 %848, %v835
        %v850 = vpop.permute.xlu0 %849
        %853 = vset.pattern.permute.xlu0 0
        %854 = vperm.xlu0 %853, %v836
        %v855 = vpop.permute.xlu0 %854
        %v857 = vmul.f32 %v808, %v840
        %v858 = vmul.f32 %v810, %v840
        %v859 = vmul.f32 %v815, %v845
        %v860 = vmul.f32 %v817, %v845
        %v861 = vmul.f32 %v822, %v850
        %v862 = vmul.f32 %v824, %v850
        %v863 = vmul.f32 %v829, %v855
        %v864 = vmul.f32 %v831, %v855
        %v865 = vld [vmem:[%s3] sm:$0xff]
        %v866 = vld [vmem:[%s3 + $0x8] sm:$0xff]
        %v867 = vld [vmem:[%s3 + $0x10] sm:$0xff]
        %v868 = vld [vmem:[%s3 + $0x18] sm:$0xff]
        %870 = vset.pattern.permute.xlu0 0
        %871 = vperm.xlu0 %870, %v865
        %v872 = vpop.permute.xlu0 %871
        %875 = vset.pattern.permute.xlu0 0
        %876 = vperm.xlu0 %875, %v866
        %v877 = vpop.permute.xlu0 %876
        %880 = vset.pattern.permute.xlu0 0
        %881 = vperm.xlu0 %880, %v867
        %v882 = vpop.permute.xlu0 %881
        %885 = vset.pattern.permute.xlu0 0
        %886 = vperm.xlu0 %885, %v868
        %v887 = vpop.permute.xlu0 %886
        %v889 = vadd.f32 %v857, %v872
        %v890 = vadd.f32 %v858, %v872
        %v891 = vadd.f32 %v859, %v877
        %v892 = vadd.f32 %v860, %v877
        %v893 = vadd.f32 %v861, %v882
        %v894 = vadd.f32 %v862, %v882
        %v895 = vadd.f32 %v863, %v887
        %v896 = vadd.f32 %v864, %v887
        %v897 = vxor.u32 %v889, 2147483648
        %v898 = vxor.u32 %v890, 2147483648
        %v899 = vxor.u32 %v891, 2147483648
        %v900 = vxor.u32 %v892, 2147483648
        %v901 = vxor.u32 %v893, 2147483648
        %v902 = vxor.u32 %v894, 2147483648
        %v903 = vxor.u32 %v895, 2147483648
        %v904 = vxor.u32 %v896, 2147483648
        %v905 = vmul.f32 %v897, 1.442695
        %v906 = vpow.pop %v905
        %v907 = vmul.f32 %v898, 1.442695
        %v908 = vpow.pop %v907
        %v909 = vmul.f32 %v899, 1.442695
        %v910 = vpow.pop %v909
        %v911 = vmul.f32 %v900, 1.442695
        %v912 = vpow.pop %v911
        %v913 = vmul.f32 %v901, 1.442695
        %v914 = vpow.pop %v913
        %v915 = vmul.f32 %v902, 1.442695
        %v916 = vpow.pop %v915
        %v917 = vmul.f32 %v903, 1.442695
        %v918 = vpow.pop %v917
        %v919 = vmul.f32 %v904, 1.442695
        %v920 = vpow.pop %v919
        %v921 = vadd.f32 %v906, 1.0
        %v922 = vadd.f32 %v908, 1.0
        %v923 = vadd.f32 %v910, 1.0
        %v924 = vadd.f32 %v912, 1.0
        %v925 = vadd.f32 %v914, 1.0
        %v926 = vadd.f32 %v916, 1.0
        %v927 = vadd.f32 %v918, 1.0
        %v928 = vadd.f32 %v920, 1.0
        %v929 = vrcp.pop %v921
        %v930 = vmul.f32 1.0, %v929
        %v931 = vrcp.pop %v922
        %v932 = vmul.f32 1.0, %v931
        %v933 = vrcp.pop %v923
        %v934 = vmul.f32 1.0, %v933
        %v935 = vrcp.pop %v924
        %v936 = vmul.f32 1.0, %v935
        %v937 = vrcp.pop %v925
        %v938 = vmul.f32 1.0, %v937
        %v939 = vrcp.pop %v926
        %v940 = vmul.f32 1.0, %v939
        %v941 = vrcp.pop %v927
        %v942 = vmul.f32 1.0, %v941
        %v943 = vrcp.pop %v928
        %v944 = vmul.f32 1.0, %v943
        %v945 = vmul.f32 %v889, %v930
        %v946 = vmul.f32 %v890, %v932
        %v947 = vmul.f32 %v891, %v934
        %v948 = vmul.f32 %v892, %v936
        %v949 = vmul.f32 %v893, %v938
        %v950 = vmul.f32 %v894, %v940
        %v951 = vmul.f32 %v895, %v942
        %v952 = vmul.f32 %v896, %v944
        %953 = vst [vmem:[%s190] sm:$0xff] %v945
        %954 = vst [vmem:[%s190 + $0x8] sm:$0xff] %v946
        %955 = vst [vmem:[%s190 + $0x10] sm:$0xff] %v947
        %956 = vst [vmem:[%s190 + $0x18] sm:$0xff] %v948
        %957 = vst [vmem:[%s190 + $0x20] sm:$0xff] %v949
        %958 = vst [vmem:[%s190 + $0x28] sm:$0xff] %v950
        %959 = vst [vmem:[%s190 + $0x30] sm:$0xff] %v951
        %960 = vst [vmem:[%s190 + $0x38] sm:$0xff] %v952
        %s961 = sand.u32 %s115, 1
        %s962 = scalar_lea.sflag [#allocation3], %s961
        %s963 = sand.u32 %s115, 1
        %s964 = smul.addr %s963, 64
        %s965 = scalar_lea.vmem [#allocation2], %s964
        // Predicated region
        $region37: #{tpu_custom_call.1} parent=35 // pred_check
          %p966 = pneg %p125
        $region38: #{tpu_custom_call.1} parent=35 // pred_check_branch
          %968 = sbr.rel (%p966) target = $region40
        $region39: #{tpu_custom_call.1} parent=35 // pred_region
          %s970 = ssub.s32 1024, 1024
          %971 = vsyncadd %s962, %s970
          %s972 = smul.addr %s18, 8
          %s973 = smul.addr %s972, 128
          %s974 = scalar_lea.hbm %s4, %s973
          %s975 = sshll.u32 %s965, 4
          %s976 = int_to_ptr.vmem [resolvable:$true] %s975
          %981 = dma.vmem_to_hbm [thread:$0]  %s976, 1024, %s974, %s962, 256, 256, 16
        $region40: #{tpu_custom_call.1} parent=35 // pred_fallthru
          _
      $region36: #{tpu_custom_call.1} parent=5 // pred_fallthru
        _
      %p982 = scmp.le.s32.totalorder 2, %s13
      // Predicated region
      $region41: #{tpu_custom_call.1} parent=5 // pred_check
        %p983 = pneg %p982
      $region42: #{tpu_custom_call.1} parent=5 // pred_check_branch
        %985 = sbr.rel (%p983) target = $region44
      $region43: #{tpu_custom_call.1} parent=5 // pred_region
        %s986 = ssub.s32 %s13, 2
        // Predicated region
        $region45: #{tpu_custom_call.1} parent=43 // pred_check
          %p987 = pneg %p131
        $region46: #{tpu_custom_call.1} parent=43 // pred_check_branch
          %989 = sbr.rel (%p987) target = $region48
        $region47: #{tpu_custom_call.1} parent=43 // pred_region
          %s990 = sand.u32 %s116, 1
          %s991 = scalar_lea.sflag [#allocation3], %s990
          %s992 = sand.u32 %s116, 1
          %s993 = smul.addr %s992, 64
          %s994 = scalar_lea.vmem [#allocation2], %s993
          %995 = dma.done %s991, 1024
        $region48: #{tpu_custom_call.1} parent=43 // pred_fallthru
          _
      $region44: #{tpu_custom_call.1} parent=5 // pred_fallthru
        _
    $region6: #{tpu_custom_call.1} parent=1 // loop_footer
      %s17 = sadd.s32 1, %s13
    $region7: #{tpu_custom_call.1} parent=1 // loop_footer_branch
      %12 = sbr.rel target = $region3
    $region8: #{tpu_custom_call.1} parent=1 // loop_exit
      _
    %996 = vsyncpa [#allocation3], 1
    %s997 = scalar_lea.sflag [#allocation3], 1
    %998 = vsyncpa %s997, 1

</llo_original>
